<compile_context>
chip_gen: v5e
topology: v5e:2x2
jax: 0.10.0
libtpu: 0.0.40
codegen_flags: <defaults>
</compile_context>

<pallas_src>
import jax
import jax.numpy as jnp
from jax import lax
from jax.experimental import pallas as pl
from jax.experimental.pallas import tpu as pltpu


def _round_up(x, m):
    return (x + m - 1) // m * m


def _tpu_vmem_capacity_bytes():
    """Physical VMEM per TensorCore; conservative (v7x) fallback if undetectable."""
    try:
        info = pltpu.get_tpu_info()
        cap = getattr(info, "vmem_capacity_bytes", None)
        if cap:
            return int(cap)
    except Exception:
        pass
    return 64 * 1024 * 1024


# Cap on per-chunk f32 intermediates (e2 / energy) inside the kernel.
_INTERM_BUDGET = 8 * 1024 * 1024


def _select_seq_chunk(S, TB, H):
    """Largest S-chunk whose f32 intermediates stay under _INTERM_BUDGET."""
    per_row = TB * H * 4 * 3 + TB * 2 * H * 4          # e2 + energy + temp, per enc row
    sc = max(8, _INTERM_BUDGET // per_row)
    if sc >= S:
        return S
    if sc >= 128:
        sc = sc // 128 * 128                           # lane-aligned chunk stores
    return int(sc)


def _select_batch_tile(S, S_out, H, enc_itemsize, tile_align, tile_budget):
    """Largest TB (multiple of tile_align) whose VMEM working set fits the budget."""
    def working_set(tb):
        enc_db = 2 * S * tb * 2 * H * enc_itemsize     # double-buffered enc block
        small = tb * S_out * 4 * 5                     # mask(x2) + out(x2) + scores scratch
        small += 2 * tb * H * 4                        # pre_h (x2)
        interm = min(_INTERM_BUDGET, S * tb * (H * 4 * 3 + 2 * H * 4))
        weights = 2 * (2 * H * H * enc_itemsize + H * 4)
        return enc_db + small + interm + weights

    best = tile_align
    tb = tile_align
    while tb <= 256:
        if working_set(tb) > tile_budget:
            break
        best = tb
        tb += tile_align
    return best


def _make_attention_kernel(S, S_out, SC):
    """Kernel factory: S (real seq len), S_out (lane-padded), SC (seq chunk)."""
    num_full = S // SC
    rem = S - num_full * SC

    def kernel(pre_h_ref, enc_ref, mask_ref, wet_ref, v_ref, out_ref, scores_ref):
        # pre_h_ref : (TB, H)  f32        enc_ref   : (S, TB, 2H) compute dtype
        # mask_ref  : (TB, S_out) int32   wet_ref   : (2H, H) compute dtype
        # v_ref     : (1, H)  f32         out_ref   : (TB, S_out) f32
        # scores_ref: (TB, S_out) f32 VMEM scratch
        TB, H = pre_h_ref.shape
        twoH = enc_ref.shape[2]

        pre_h = pre_h_ref[...][None, :, :]             # (1, TB, H) f32
        wet = wet_ref[...]                             # (2H, H)
        v_b = v_ref[...].reshape(1, 1, H)              # (1, 1, H) f32

        def process_chunk(off, size):
            # (size, TB, 2H) -> (size*TB, 2H): TB is a multiple of the sublane
            # tile so this reshape is a relabel, not a copy.
            enc_c = enc_ref[pl.ds(off, size), :, :]
            e2 = jnp.dot(enc_c.reshape(size * TB, twoH), wet,
                         preferred_element_type=jnp.float32)           # (size*TB, H)
            energy = jnp.tanh(e2.reshape(size, TB, H) + pre_h)         # (size, TB, H)
            # v projection: VPU multiply + lane reduce (no N=1 MXU push).
            sc_st = jnp.sum(energy * v_b, axis=2)                      # (size, TB)
            scores_ref[:, pl.ds(off, size)] = jnp.transpose(sc_st, (1, 0))

        if num_full <= 4:                              # static unroll, static offsets
            for c in range(num_full):
                process_chunk(c * SC, SC)
        else:
            @pl.loop(0, num_full)
            def _(c):
                off = c * SC
                if SC % 128 == 0:
                    off = pl.multiple_of(off, 128)
                process_chunk(off, SC)
        if rem:
            process_chunk(num_full * SC, rem)

        # masked_fill(mask == 0, -1e10) + softmax over the (lane-dense) seq axis.
        scores = scores_ref[...]
        scores = jnp.where(mask_ref[...] == 0, jnp.float32(-1e10), scores)
        if S_out != S:
            # Padded lanes get exactly zero weight (keeps all-masked rows at 1/S).
            col = lax.broadcasted_iota(jnp.int32, (TB, S_out), 1)
            scores = jnp.where(col < S, scores, -jnp.inf)
        mx = jnp.max(scores, axis=1, keepdims=True)
        e = jnp.exp(scores - mx)
        denom = jnp.sum(e, axis=1, keepdims=True)
        out_ref[...] = (e * pl.reciprocal(denom)).astype(out_ref.dtype)

    return kernel


def attention_pallas(hidden, encoder_outputs, mask, w_attn, b_attn, v_weight,
                     *, batch_tile=None, seq_chunk=None, compute_dtype=None):
    """hidden: [B,H]; encoder_outputs: [S,B,2H] (native seq-first layout);
    mask: [B,S]; w_attn: [H,3H]; b_attn: [H]; v_weight: [1,H] (PyTorch nn.Linear
    orientation).  Returns softmax attention weights [B,S] (f32).

    compute_dtype: dtype of the encoder stream / We^T fed to the MXU.  Defaults
    to the encoder's own dtype, so a bf16-emitting encoder is consumed with no
    extra HBM cast pass (accumulation / tanh / softmax stay f32).  Pass
    jnp.float32 for bit-faithful PyTorch numerics.
    """
    S, B, twoH = encoder_outputs.shape
    H = hidden.shape[1]
    assert twoH == 2 * H
    assert mask.shape == (B, S)

    if compute_dtype is None:
        compute_dtype = (jnp.bfloat16 if encoder_outputs.dtype == jnp.bfloat16
                         else jnp.float32)
    enc_itemsize = jnp.dtype(compute_dtype).itemsize
    # bf16 packs 2 rows per sublane -> second-to-last block dims need 16-alignment.
    tile_align = 16 if enc_itemsize < 4 else 8

    S_out = _round_up(S, 128)                  # lane-dense mask / scores / output

    cap = _tpu_vmem_capacity_bytes()
    vmem_limit = int(cap * 3 // 4)             # raise past 16/32 MiB scoped defaults
    tile_budget = int(cap * 0.55)

    if batch_tile is None:
        TB = _select_batch_tile(S, S_out, H, enc_itemsize, tile_align, tile_budget)
        TB = min(TB, _round_up(B, tile_align))
        # v7x has two TensorCores sharing the "parallel" batch axis: prefer >=2
        # batch tiles when the batch allows it (per-step overhead is ~0.35us).
        if TB >= B and B >= 2 * tile_align:
            TB = _round_up((B + 1) // 2, tile_align)
        # Avoid a pad copy of encoder_outputs when B permits: shrink TB to divide B.
        if B % tile_align == 0:
            while TB > tile_align and B % TB != 0:
                TB -= tile_align
    else:
        TB = int(batch_tile)
    if TB % tile_align != 0:
        raise ValueError(
            f"batch_tile must be a multiple of {tile_align} for {jnp.dtype(compute_dtype).name}")

    B_pad = _round_up(B, TB)
    if B_pad != B:
        # Only the tail tile pads; production batches should satisfy B % TB == 0
        # to avoid the pad copy of encoder_outputs.
        pad = B_pad - B
        hidden = jnp.pad(hidden, ((0, pad), (0, 0)))
        encoder_outputs = jnp.pad(encoder_outputs, ((0, 0), (0, pad), (0, 0)))
        mask = jnp.pad(mask, ((0, pad), (0, 0)))
    if S_out != S:
        mask = jnp.pad(mask, ((0, 0), (0, S_out - S)))   # zeros -> padded lanes masked off

    if seq_chunk is None:
        SC = _select_seq_chunk(S, TB, H)
    else:
        SC = min(int(seq_chunk), S)

    # Split the PyTorch Linear(3H->H) weight: columns [:H] act on the repeated
    # hidden state, columns [H:] on the encoder outputs (cat order = (hid, enc)).
    w_attn = jnp.asarray(w_attn)
    we_t = w_attn[:, H:].T.astype(compute_dtype)                        # (2H, H)
    # Hidden projection hoisted out of the kernel: tiny [B,H]x[H,H] XLA matmul.
    pre_h = (jnp.dot(hidden.astype(jnp.float32),
                     w_attn[:, :H].T.astype(jnp.float32),
                     precision=lax.Precision.HIGHEST)
             + jnp.asarray(b_attn, jnp.float32)[None, :])               # (B_pad, H)
    v_row = jnp.asarray(v_weight, jnp.float32).reshape(1, H)

    # Consume the big tensor in its producer dtype; only cast when it differs.
    # (Prefer the encoder emitting compute_dtype -- a host-side astype here is a
    #  full extra HBM pass over the dominant stream.)
    enc_c = (encoder_outputs if encoder_outputs.dtype == jnp.dtype(compute_dtype)
             else encoder_outputs.astype(compute_dtype))
    mask_i = mask.astype(jnp.int32)

    kernel = _make_attention_kernel(S, S_out, SC)

    grid_spec = pltpu.PrefetchScalarGridSpec(
        num_scalar_prefetch=0,
        grid=(B_pad // TB,),
        in_specs=[
            pl.BlockSpec((TB, H), lambda i: (i, 0)),            # pre_h tile (f32)
            pl.BlockSpec((S, TB, twoH), lambda i: (0, i, 0)),   # enc, native layout
            pl.BlockSpec((TB, S_out), lambda i: (i, 0)),        # mask tile (lane-dense)
            pl.BlockSpec((twoH, H), lambda i: (0, 0)),          # We^T (resident)
            pl.BlockSpec((1, H), lambda i: (0, 0)),             # v row (resident)
        ],
        out_specs=pl.BlockSpec((TB, S_out), lambda i: (i, 0)),
        scratch_shapes=[pltpu.VMEM((TB, S_out), jnp.float32)],
    )

    out = pl.pallas_call(
        kernel,
        out_shape=jax.ShapeDtypeStruct((B_pad, S_out), jnp.float32),
        grid_spec=grid_spec,
        compiler_params=pltpu.CompilerParams(
            dimension_semantics=("parallel",),
            vmem_limit_bytes=vmem_limit,
        ),
    )(pre_h, enc_c, mask_i, we_t, v_row)

    return out[:B, :S]


def attention_ref(hidden, encoder_outputs, mask, w_attn, b_attn, v_weight):
    """Pure-JAX reference matching the PyTorch forward."""
    S = encoder_outputs.shape[0]
    h = jnp.repeat(hidden.astype(jnp.float32)[:, None, :], S, axis=1)      # (B,S,H)
    eo = jnp.transpose(encoder_outputs.astype(jnp.float32), (1, 0, 2))     # (B,S,2H)
    x = jnp.concatenate([h, eo], axis=2)                                   # (B,S,3H)
    energy = jnp.tanh(
        jnp.einsum('bsk,hk->bsh', x, w_attn.astype(jnp.float32),
                   precision=lax.Precision.HIGHEST) + b_attn)              # (B,S,H)
    att = jnp.einsum('bsh,oh->bso', energy, v_weight.astype(jnp.float32),
                     precision=lax.Precision.HIGHEST)[..., 0]              # (B,S)
    att = jnp.where(mask == 0, jnp.float32(-1e10), att)
    return jax.nn.softmax(att, axis=1)


def _run_case(key, B, S, H, lengths, *, enc_dtype=jnp.float32,
              compute_dtype=None, seq_chunk=None, atol=5e-5):
    k1, k2, k3, k4, k5 = jax.random.split(key, 5)
    w_attn = jax.random.normal(k1, (H, 3 * H), jnp.float32) * 0.1   # Linear(3H->H).weight
    b_attn = jax.random.normal(k2, (H,), jnp.float32) * 0.1         # Linear(3H->H).bias
    v_weight = jax.random.normal(k3, (1, H), jnp.float32) * 0.1     # Linear(H->1).weight
    hidden = jax.random.normal(k4, (B, H), jnp.float32)
    # The "encoder" emits enc_dtype directly, so the bf16 path has no cast pass.
    encoder_outputs = jax.random.normal(k5, (S, B, 2 * H), jnp.float32).astype(enc_dtype)
    mask = (jnp.arange(S)[None, :] < lengths[:, None]).astype(jnp.int32)   # (B, S)

    out = attention_pallas(hidden, encoder_outputs, mask, w_attn, b_attn, v_weight,
                           compute_dtype=compute_dtype, seq_chunk=seq_chunk)
    out = jax.block_until_ready(out)
    ref = attention_ref(hidden, encoder_outputs, mask, w_attn, b_attn, v_weight)
    assert out.shape == (B, S), out.shape
    err = float(jnp.max(jnp.abs(out - ref)))
    assert err <= atol, (err, atol)
    assert bool(jnp.allclose(out.sum(axis=1), 1.0, atol=1e-3))


if __name__ == "__main__":
    key = jax.random.PRNGKey(0)
    ka, kb, kc = jax.random.split(key, 3)

    # Small shape implied by the module (batch=2, seq=8, hidden=32): exact f32 path.
    _run_case(ka, B=2, S=8, H=32,
              lengths=jnp.array([8, 5], dtype=jnp.int32),
              enc_dtype=jnp.float32, compute_dtype=jnp.float32, atol=5e-5)

    # bf16 encoder stream (primary production path): lane-dense S, chunked seq loop.
    _run_case(kb, B=16, S=256, H=32,
              lengths=jnp.minimum(jnp.arange(1, 17, dtype=jnp.int32) * 16, 256),
              enc_dtype=jnp.bfloat16, seq_chunk=128, atol=2e-2)

    # Non-multiple-of-128 sequence (padded lanes + ragged tail chunk) with bf16.
    _run_case(kc, B=4, S=200, H=32,
              lengths=jnp.array([200, 120, 64, 1], dtype=jnp.int32),
              enc_dtype=jnp.bfloat16, seq_chunk=128, atol=2e-2)

    print("KERNEL_OK")
</pallas_src>

<mosaic_0001>
module attributes {stable_mosaic.version = 11 : i64} {
  func.func @kernel(%arg0: i32, %arg1: memref<8x32xf32, #tpu.memory_space<vmem>>, %arg2: memref<8x8x64xf32, #tpu.memory_space<vmem>>, %arg3: memref<8x128xi32, #tpu.memory_space<vmem>>, %arg4: memref<64x32xf32, #tpu.memory_space<vmem>>, %arg5: memref<1x32xf32, #tpu.memory_space<vmem>>, %arg6: memref<8x128xf32, #tpu.memory_space<vmem>>, %arg7: memref<8x128xf32, #tpu.memory_space<vmem>>) attributes {dimension_semantics = [#tpu.dimension_semantics<parallel>], iteration_bounds = array<i64: 1>, scalar_prefetch = 0 : i64, scratch_operands = 1 : i64, tpu.core_type = #tpu.core_type<tc>, window_params = [{transform_indices = @transform_0, window_bounds = array<i64: 8, 32>}, {transform_indices = @transform_1, window_bounds = array<i64: 8, 8, 64>}, {transform_indices = @transform_2, window_bounds = array<i64: 8, 128>}, {pipeline_mode = #tpu.pipeline_mode<synchronous>, transform_indices = @transform_3, window_bounds = array<i64: 64, 32>}, {pipeline_mode = #tpu.pipeline_mode<synchronous>, transform_indices = @transform_4, window_bounds = array<i64: 1, 32>}, {transform_indices = @transform_5, window_bounds = array<i64: 8, 128>}]} {
    %c0 = arith.constant 0 : index
    %c0_0 = arith.constant 0 : index
    %0 = vector.load %arg1[%c0, %c0_0] : memref<8x32xf32, #tpu.memory_space<vmem>>, vector<8x32xf32>
    %1 = vector.shape_cast %0 : vector<8x32xf32> to vector<1x8x32xf32>
    %c0_1 = arith.constant 0 : index
    %c0_2 = arith.constant 0 : index
    %2 = vector.load %arg4[%c0_1, %c0_2] : memref<64x32xf32, #tpu.memory_space<vmem>>, vector<64x32xf32>
    %c0_3 = arith.constant 0 : index
    %c0_4 = arith.constant 0 : index
    %3 = vector.load %arg5[%c0_3, %c0_4] : memref<1x32xf32, #tpu.memory_space<vmem>>, vector<1x32xf32>
    %4 = vector.shape_cast %3 : vector<1x32xf32> to vector<1x1x32xf32>
    %c0_5 = arith.constant 0 : index
    %c0_6 = arith.constant 0 : index
    %c0_7 = arith.constant 0 : index
    %5 = vector.load %arg2[%c0_5, %c0_6, %c0_7] : memref<8x8x64xf32, #tpu.memory_space<vmem>>, vector<8x8x64xf32>
    %6 = vector.shape_cast %5 : vector<8x8x64xf32> to vector<64x64xf32>
    %cst = arith.constant dense<0.000000e+00> : vector<64x32xf32>
    %7 = tpu.matmul %6, %2, %cst {dimension_numbers = #tpu.dot_dimension_numbers<[1], [0], [0], [1], [0, 0, 1, 1], [], []>} : vector<64x64xf32>, vector<64x32xf32>, vector<64x32xf32> -> vector<64x32xf32>
    %8 = vector.shape_cast %7 : vector<64x32xf32> to vector<8x8x32xf32>
    %9 = vector.broadcast %1 : vector<1x8x32xf32> to vector<8x8x32xf32>
    %10 = arith.addf %8, %9 : vector<8x8x32xf32>
    %11 = math.tanh %10 : vector<8x8x32xf32>
    %12 = vector.broadcast %4 : vector<1x1x32xf32> to vector<8x8x32xf32>
    %13 = arith.mulf %11, %12 : vector<8x8x32xf32>
    %cst_8 = arith.constant dense<0.000000e+00> : vector<8x8xf32>
    %14 = vector.multi_reduction <add>, %13, %cst_8 [2] : vector<8x8x32xf32> to vector<8x8xf32>
    %15 = tpu.transpose %14, [1, 0] : vector<8x8xf32> -> vector<8x8xf32>
    %c0_9 = arith.constant 0 : index
    %c0_10 = arith.constant 0 : index
    %16 = vector.load %arg7[%c0_9, %c0_10] : memref<8x128xf32, #tpu.memory_space<vmem>>, vector<8x8xf32>
    tpu.vector_store %arg7[%c0_9, %c0_10], %15 {strides = array<i32>} : memref<8x128xf32, #tpu.memory_space<vmem>>, vector<8x8xf32>,
    %c0_11 = arith.constant 0 : index
    %c0_12 = arith.constant 0 : index
    %17 = vector.load %arg7[%c0_11, %c0_12] : memref<8x128xf32, #tpu.memory_space<vmem>>, vector<8x128xf32>
    %c0_13 = arith.constant 0 : index
    %c0_14 = arith.constant 0 : index
    %18 = vector.load %arg3[%c0_13, %c0_14] : memref<8x128xi32, #tpu.memory_space<vmem>>, vector<8x128xi32>
    %c0_i32 = arith.constant 0 : i32
    %19 = vector.broadcast %c0_i32 : i32 to vector<8x128xi32>
    %20 = arith.cmpi eq, %18, %19 : vector<8x128xi32>
    %cst_15 = arith.constant -1.000000e+10 : f32
    %21 = vector.broadcast %cst_15 : f32 to vector<8x128xf32>
    %22 = arith.select %20, %21, %17 : vector<8x128xi1>, vector<8x128xf32>
    %23 = tpu.iota {dimensions = array<i32: 1>} : vector<8x128xi32>
    %c8_i32 = arith.constant 8 : i32
    %24 = vector.broadcast %c8_i32 : i32 to vector<8x128xi32>
    %25 = arith.cmpi slt, %23, %24 : vector<8x128xi32>
    %cst_16 = arith.constant 0xFF800000 : f32
    %26 = vector.broadcast %cst_16 : f32 to vector<8x128xf32>
    %27 = arith.select %25, %22, %26 : vector<8x128xi1>, vector<8x128xf32>
    %cst_17 = arith.constant dense<0xFF800000> : vector<8xf32>
    %28 = vector.multi_reduction <maximumf>, %27, %cst_17 [1] : vector<8x128xf32> to vector<8xf32>
    %29 = vector.shape_cast %28 : vector<8xf32> to vector<8x1xf32>
    %30 = vector.broadcast %29 : vector<8x1xf32> to vector<8x128xf32>
    %31 = arith.subf %27, %30 : vector<8x128xf32>
    %32 = math.exp %31 : vector<8x128xf32>
    %cst_18 = arith.constant dense<0.000000e+00> : vector<8xf32>
    %33 = vector.multi_reduction <add>, %32, %cst_18 [1] : vector<8x128xf32> to vector<8xf32>
    %34 = vector.shape_cast %33 : vector<8xf32> to vector<8x1xf32>
    %35 = tpu.reciprocal %34 : vector<8x1xf32> -> vector<8x1xf32>
    %36 = vector.broadcast %35 : vector<8x1xf32> to vector<8x128xf32>
    %37 = arith.mulf %32, %36 : vector<8x128xf32>
    %c0_19 = arith.constant 0 : index
    %c0_20 = arith.constant 0 : index
    %38 = vector.load %arg6[%c0_19, %c0_20] : memref<8x128xf32, #tpu.memory_space<vmem>>, vector<8x128xf32>
    tpu.vector_store %arg6[%c0_19, %c0_20], %37 {strides = array<i32>} : memref<8x128xf32, #tpu.memory_space<vmem>>, vector<8x128xf32>,
    return
  }
  func.func @transform_0(%arg0: i32) -> (i32, i32) {
    %c0_i32 = arith.constant 0 : i32
    %c0_i32_0 = arith.constant 0 : i32
    return %arg0, %c0_i32 : i32, i32
  }
  func.func @transform_1(%arg0: i32) -> (i32, i32, i32) {
    %c0_i32 = arith.constant 0 : i32
    %c0_i32_0 = arith.constant 0 : i32
    %c0_i32_1 = arith.constant 0 : i32
    return %c0_i32, %arg0, %c0_i32_0 : i32, i32, i32
  }
  func.func @transform_2(%arg0: i32) -> (i32, i32) {
    %c0_i32 = arith.constant 0 : i32
    %c0_i32_0 = arith.constant 0 : i32
    return %arg0, %c0_i32 : i32, i32
  }
  func.func @transform_3(%arg0: i32) -> (i32, i32) {
    %c0_i32 = arith.constant 0 : i32
    %c0_i32_0 = arith.constant 0 : i32
    %c0_i32_1 = arith.constant 0 : i32
    return %c0_i32, %c0_i32_0 : i32, i32
  }
  func.func @transform_4(%arg0: i32) -> (i32, i32) {
    %c0_i32 = arith.constant 0 : i32
    %c0_i32_0 = arith.constant 0 : i32
    %c0_i32_1 = arith.constant 0 : i32
    return %c0_i32, %c0_i32_0 : i32, i32
  }
  func.func @transform_5(%arg0: i32) -> (i32, i32) {
    %c0_i32 = arith.constant 0 : i32
    %c0_i32_0 = arith.constant 0 : i32
    return %arg0, %c0_i32 : i32, i32
  }
}

</mosaic_0001>

<llo_original>
// kernel: tpu_custom_call.1
$region0: #{tpu_custom_call.1}
  #allocation0 [shape = 'u32[]', space=smem, size = 0x4, offset = 0x4, fixed_abs, tag = 'smem constant byte address 0x4 - core index']
  #allocation1 [shape = 'u32[72,128]{1,0:T(1,128)}', space=vmem, size = 0x9000, scoped, tag = 'internal scratch']
  #allocation2 [shape = 'f32[8,128]{1,0:T(8,128)}', space=vmem, size = 0x1000, scoped, tag = 'scratch operand']
  %s0 = inlined_call_operand.vmem [shape: f32[8,32], index: 0, kind: input, shape index: {}]
  %s1 = inlined_call_operand.vmem [shape: f32[8,8,64], index: 1, kind: input, shape index: {}]
  %s2 = inlined_call_operand.vmem [shape: s32[8,128], index: 2, kind: input, shape index: {}]
  %s3 = inlined_call_operand.vmem [shape: f32[64,32], index: 3, kind: input, shape index: {}]
  %s4 = inlined_call_operand.vmem [shape: f32[1,32], index: 4, kind: input, shape index: {}]
  %s5 = inlined_call_operand.hbm [shape: f32[8,128], index: 5, kind: output, shape index: {}]
  %s6 = sld [smem:[#allocation0]]
  $region30: #{tpu_custom_call.1} parent=0
    _
  %s8 = ssub.s32 1, %s6
  %s9 = scalar_select 0, %s8, %s6
  $region1: #{tpu_custom_call.1} parent=0
    #allocation3 [shape = 'u8[4096]{0}', space=vmem, size = 0x1000, scoped, tag = 'output window, operand 0, single buffered']
    #allocation4 [shape = 's32[1]{0}', space=sflag, size = 0x4, scoped, tag = 'scoped memory for tpu_custom_call.1']
    %10 = vsyncpa [#allocation4], 0
    // Predicated region
    $region2: #{tpu_custom_call.1} parent=1 // pred_check
      _
    $region3: #{tpu_custom_call.1} parent=1 // pred_check_branch
      %12 = sbr.rel (0) target = $region5
    $region4: #{tpu_custom_call.1} parent=1 // pred_region
      _
    $region5: #{tpu_custom_call.1} parent=1 // pred_fallthru
      _
    // Predicated region
    $region6: #{tpu_custom_call.1} parent=1 // pred_check
      _
    $region7: #{tpu_custom_call.1} parent=1 // pred_check_branch
      %14 = sbr.rel (0) target = $region9
    $region8: #{tpu_custom_call.1} parent=1 // pred_region
      _
    $region9: #{tpu_custom_call.1} parent=1 // pred_fallthru
      _
    // Predicated region
    $region10: #{tpu_custom_call.1} parent=1 // pred_check
      _
    $region11: #{tpu_custom_call.1} parent=1 // pred_check_branch
      %16 = sbr.rel (0) target = $region13
    $region12: #{tpu_custom_call.1} parent=1 // pred_region
      _
    $region13: #{tpu_custom_call.1} parent=1 // pred_fallthru
      _
    // Predicated region
    $region14: #{tpu_custom_call.1} parent=1 // pred_check
      _
    $region15: #{tpu_custom_call.1} parent=1 // pred_check_branch
      %18 = sbr.rel (0) target = $region17
    $region16: #{tpu_custom_call.1} parent=1 // pred_region
      _
    $region17: #{tpu_custom_call.1} parent=1 // pred_fallthru
      _
    // Predicated region
    $region18: #{tpu_custom_call.1} parent=1 // pred_check
      _
    $region19: #{tpu_custom_call.1} parent=1 // pred_check_branch
      %20 = sbr.rel (0) target = $region21
    $region20: #{tpu_custom_call.1} parent=1 // pred_region
      _
    $region21: #{tpu_custom_call.1} parent=1 // pred_fallthru
      _
    %v21 = vld [vmem:[%s0] sm:$0xff]
    %v22 = vld [vmem:[%s3] sm:$0xff]
    %v23 = vld [vmem:[%s3 + $0x8] sm:$0xff]
    %v24 = vld [vmem:[%s3 + $0x10] sm:$0xff]
    %v25 = vld [vmem:[%s3 + $0x18] sm:$0xff]
    %v26 = vld [vmem:[%s3 + $0x20] sm:$0xff]
    %v27 = vld [vmem:[%s3 + $0x28] sm:$0xff]
    %v28 = vld [vmem:[%s3 + $0x30] sm:$0xff]
    %v29 = vld [vmem:[%s3 + $0x38] sm:$0xff]
    %v30 = vld [vmem:[%s4] sm:$0x1]
    %v31 = vld [vmem:[%s1] sm:$0xff]
    %v32 = vld [vmem:[%s1 + $0x8] sm:$0xff]
    %v33 = vld [vmem:[%s1 + $0x10] sm:$0xff]
    %v34 = vld [vmem:[%s1 + $0x18] sm:$0xff]
    %v35 = vld [vmem:[%s1 + $0x20] sm:$0xff]
    %v36 = vld [vmem:[%s1 + $0x28] sm:$0xff]
    %v37 = vld [vmem:[%s1 + $0x30] sm:$0xff]
    %v38 = vld [vmem:[%s1 + $0x38] sm:$0xff]
    %vm39 = vcmask 523264
    %v41 = vsel %vm39, %v31, 0
    %v44 = vsel %vm39, %v32, 0
    %v47 = vsel %vm39, %v33, 0
    %v50 = vsel %vm39, %v34, 0
    %v53 = vsel %vm39, %v35, 0
    %v56 = vsel %vm39, %v36, 0
    %v59 = vsel %vm39, %v37, 0
    %v62 = vsel %vm39, %v38, 0
    %64 = vmatpush.msra.mxu0 0.0
    %65 = vmatpush.msra.mxu0 0.0
    %66 = vmatpush.msra.mxu0 0.0
    %67 = vmatpush.msra.mxu0 0.0
    %68 = vmatpush.msra.mxu0 0.0
    %69 = vmatpush.msra.mxu0 0.0
    %70 = vmatpush.msra.mxu0 0.0
    %71 = vmatpush.msra.mxu0 0.0
    %72 = vmatpush.msra.mxu0 %v29
    %73 = vmatpush.msra.mxu0 %v28
    %74 = vmatpush.msra.mxu0 %v27
    %75 = vmatpush.msra.mxu0 %v26
    %76 = vmatpush.msra.mxu0 %v25
    %77 = vmatpush.msra.mxu0 %v24
    %78 = vmatpush.msra.mxu0 %v23
    %79 = vmatpush.msra.mxu0 %v22
    %80 = vmatmul.f32.gmra.mxu0 %v41
    %v81 = vpop.f32.mrf.mxu0
    %v82 = vadd.f32 0.0, %v81
    %83 = vmatmul.f32.gmra.mxu0 %v44
    %v84 = vpop.f32.mrf.mxu0
    %v85 = vadd.f32 0.0, %v84
    %86 = vmatmul.f32.gmra.mxu0 %v47
    %v87 = vpop.f32.mrf.mxu0
    %v88 = vadd.f32 0.0, %v87
    %89 = vmatmul.f32.gmra.mxu0 %v50
    %v90 = vpop.f32.mrf.mxu0
    %v91 = vadd.f32 0.0, %v90
    %92 = vmatmul.f32.gmra.mxu0 %v53
    %v93 = vpop.f32.mrf.mxu0
    %v94 = vadd.f32 0.0, %v93
    %95 = vmatmul.f32.gmra.mxu0 %v56
    %v96 = vpop.f32.mrf.mxu0
    %v97 = vadd.f32 0.0, %v96
    %98 = vmatmul.f32.gmra.mxu0 %v59
    %v99 = vpop.f32.mrf.mxu0
    %v100 = vadd.f32 0.0, %v99
    %101 = vmatmul.f32.gmra.mxu0 %v62
    %v102 = vpop.f32.mrf.mxu0
    %v103 = vadd.f32 0.0, %v102
    %104 = vdwg.mxu0
    %v105 = vadd.f32 %v82, %v21
    %v106 = vadd.f32 %v85, %v21
    %v107 = vadd.f32 %v88, %v21
    %v108 = vadd.f32 %v91, %v21
    %v109 = vadd.f32 %v94, %v21
    %v110 = vadd.f32 %v97, %v21
    %v111 = vadd.f32 %v100, %v21
    %v112 = vadd.f32 %v103, %v21
    %v113 = vtanh.pop %v105
    %v114 = vtanh.pop %v106
    %v115 = vtanh.pop %v107
    %v116 = vtanh.pop %v108
    %v117 = vtanh.pop %v109
    %v118 = vtanh.pop %v110
    %v119 = vtanh.pop %v111
    %v120 = vtanh.pop %v112
    %v122 = vperm.slane %v30, 0
    %v124 = vmul.f32 %v113, %v122
    %v125 = vmul.f32 %v114, %v122
    %v126 = vmul.f32 %v115, %v122
    %v127 = vmul.f32 %v116, %v122
    %v128 = vmul.f32 %v117, %v122
    %v129 = vmul.f32 %v118, %v122
    %v130 = vmul.f32 %v119, %v122
    %v131 = vmul.f32 %v120, %v122
    %vm132 = vcmask 261120
    %v133 = vsel %vm132, %v124, 0.0
    %134 = vadd.xlane.f32.xlu0 %v133
    %v135 = vpop.xlane.xlu0 %134
    %v136 = vsel %vm132, %v125, 0.0
    %137 = vadd.xlane.f32.xlu0 %v136
    %v138 = vpop.xlane.xlu0 %137
    %v139 = vsel %vm132, %v126, 0.0
    %140 = vadd.xlane.f32.xlu0 %v139
    %v141 = vpop.xlane.xlu0 %140
    %v142 = vsel %vm132, %v127, 0.0
    %143 = vadd.xlane.f32.xlu0 %v142
    %v144 = vpop.xlane.xlu0 %143
    %v145 = vsel %vm132, %v128, 0.0
    %146 = vadd.xlane.f32.xlu0 %v145
    %v147 = vpop.xlane.xlu0 %146
    %v148 = vsel %vm132, %v129, 0.0
    %149 = vadd.xlane.f32.xlu0 %v148
    %v150 = vpop.xlane.xlu0 %149
    %v151 = vsel %vm132, %v130, 0.0
    %152 = vadd.xlane.f32.xlu0 %v151
    %v153 = vpop.xlane.xlu0 %152
    %v154 = vsel %vm132, %v131, 0.0
    %155 = vadd.xlane.f32.xlu0 %v154
    %v156 = vpop.xlane.xlu0 %155
    %v165 = vlaneseq
    %v166 = vand.u32 %v165, 127
    %v167 = vperm.slane %v135, %v166
    %v168 = vperm.slane %v138, %v166
    %v169 = vperm.slane %v141, %v166
    %v170 = vperm.slane %v144, %v166
    %v171 = vperm.slane %v147, %v166
    %v172 = vperm.slane %v150, %v166
    %v173 = vperm.slane %v153, %v166
    %v174 = vperm.slane %v156, %v166
    %vm175 = vcmask 1041409
    %v176 = vsel %vm175, %v168, %v167
    %vm177 = vcmask 1042434
    %v178 = vsel %vm177, %v169, %v176
    %vm179 = vcmask 1043459
    %v180 = vsel %vm179, %v170, %v178
    %vm181 = vcmask 1044484
    %v182 = vsel %vm181, %v171, %v180
    %vm183 = vcmask 1045509
    %v184 = vsel %vm183, %v172, %v182
    %vm185 = vcmask 1046534
    %v186 = vsel %vm185, %v173, %v184
    %vm187 = vcmask 1047559
    %v188 = vsel %vm187, %v174, %v186
    %190 = vxpose.xlu0.b32.start [1/16] %v188, 128
    %191 = vxpose.xlu0.b32.cont [2/16] 0.0, 128
    %192 = vxpose.xlu0.b32.cont [3/16] 0.0, 128
    %193 = vxpose.xlu0.b32.cont [4/16] 0.0, 128
    %194 = vxpose.xlu0.b32.cont [5/16] 0.0, 128
    %195 = vxpose.xlu0.b32.cont [6/16] 0.0, 128
    %196 = vxpose.xlu0.b32.cont [7/16] 0.0, 128
    %197 = vxpose.xlu0.b32.cont [8/16] 0.0, 128
    %198 = vxpose.xlu0.b32.cont [9/16] 0.0, 128
    %199 = vxpose.xlu0.b32.cont [10/16] 0.0, 128
    %200 = vxpose.xlu0.b32.cont [11/16] 0.0, 128
    %201 = vxpose.xlu0.b32.cont [12/16] 0.0, 128
    %202 = vxpose.xlu0.b32.cont [13/16] 0.0, 128
    %203 = vxpose.xlu0.b32.cont [14/16] 0.0, 128
    %204 = vxpose.xlu0.b32.cont [15/16] 0.0, 128
    %205 = vxpose.xlu0.b32.end [16/16] 0.0, 128
    %v206 = vpop.trf.xlu0
    %v207 = vpop.trf.xlu0
    %v208 = vpop.trf.xlu0
    %v209 = vpop.trf.xlu0
    %v210 = vpop.trf.xlu0
    %v211 = vpop.trf.xlu0
    %v212 = vpop.trf.xlu0
    %v213 = vpop.trf.xlu0
    %v214 = vpop.trf.xlu0
    %v215 = vpop.trf.xlu0
    %v216 = vpop.trf.xlu0
    %v217 = vpop.trf.xlu0
    %v218 = vpop.trf.xlu0
    %v219 = vpop.trf.xlu0
    %v220 = vpop.trf.xlu0
    %v221 = vpop.trf.xlu0
    %vm222 = vcmask 64512
    %223 = vst.msk [vmem:[#allocation2] sm:$0xff] %vm222, %v206
    %v224 = vld [vmem:[#allocation2] sm:$0xff]
    %v225 = vld [vmem:[%s2] sm:$0xff]
    %vm226 = vcmp.eq.s32.totalorder %v225, 0
    %v227 = vsel %vm226, -1e+10, %v224
    %vm228 = vcmp.lt.s32.totalorder %v166, 8
    %v229 = vsel %vm228, %v227, -inf
    %230 = vmax.xlane.f32.xlu0 %v229
    %v231 = vpop.xlane.xlu0 %230
    %v232 = vsub.f32 %v229, %v231
    %v233 = vmul.f32 %v232, 1.442695
    %v234 = vpow.pop %v233
    %235 = vadd.xlane.f32.xlu0 %v234
    %v236 = vpop.xlane.xlu0 %235
    %v237 = vrcp.pop %v236
    %v238 = vmul.f32 %v236, %v237
    %v239 = vsub.f32 1.0, %v238
    %v240 = vmul.f32 %v237, %v239
    %v241 = vadd.f32 %v237, %v240
    %vm242 = vweird.f32 %v236
    %vm243 = vweird.f32 %v237
    %vm244 = vmor %vm242, %vm243
    %v245 = vsel %vm244, %v237, %v241
    %v246 = vand.u32 2147483647, %v236
    %vm247 = vcmp.eq.f32.partialorder %v246, 8.507059e+37
    %v248 = vand.u32 %v236, 2147483648
    %v249 = vor.u32 1.1754944e-38, %v248
    %v250 = vsel %vm247, %v249, %v245
    %v251 = vmul.f32 %v234, %v250
    %252 = vst [vmem:[#allocation3] sm:$0xff] %v251
    // Predicated region
    $region22: #{tpu_custom_call.1} parent=1 // pred_check
      _
    $region23: #{tpu_custom_call.1} parent=1 // pred_check_branch
      %254 = sbr.rel (0) target = $region25
    $region24: #{tpu_custom_call.1} parent=1 // pred_region
      %256 = vsyncadd [#allocation4], 0
      %s258 = sshll.u32 [#allocation3], 4
      %s259 = int_to_ptr.vmem [resolvable:$true] %s258
      %s260 = sshll.u32 %s5, 4
      %s261 = int_to_ptr.hbm [resolvable:$true] %s260
      %263 = dma.vmem_to_hbm [thread:$0]  %s259, 128, %s261, [#allocation4]
    $region25: #{tpu_custom_call.1} parent=1 // pred_fallthru
      _
    // Predicated region
    $region26: #{tpu_custom_call.1} parent=1 // pred_check
      _
    $region27: #{tpu_custom_call.1} parent=1 // pred_check_branch
      %265 = sbr.rel (0) target = $region29
    $region28: #{tpu_custom_call.1} parent=1 // pred_region
      %267 = dma.done [#allocation4], 128
    $region29: #{tpu_custom_call.1} parent=1 // pred_fallthru
      _
    %268 = vsyncpa [#allocation4], 1

</llo_original>
